<compile_context>
chip_gen: v6e
topology: v6e:2x2x1
jax: 0.10.0
libtpu: 0.0.40
codegen_flags: <defaults>
</compile_context>

<pallas_src>
import functools

import jax
import jax.numpy as jnp
import numpy as np
from jax.experimental import pallas as pl
from jax.experimental.pallas import tpu as pltpu

IMAGE_SIZE = 784
H1, H2, NUM_CLASSES = 100, 50, 10
H_PAD, C_PAD = 128, 128          # lane-dense padding for hidden / class dims
EPS = 1e-5                       # BatchNorm eps (torch default)


def _round_up(n, m):
    return (n + m - 1) // m * m


def _pad2(a, rows, cols, val=0.0):
    return jnp.pad(a, ((0, rows - a.shape[0]), (0, cols - a.shape[1])),
                   constant_values=val)


def _fused_mlp_kernel(x_ref, w0_ref, b0_ref, w1_ref, b1_ref, w2_ref, b2_ref,
                      out_ref, *, num_classes):
    # x tile arrives in its native dtype; cast to bf16 only for the MXU.
    xb = x_ref[...].astype(jnp.bfloat16)

    # fc0 (BN1 folded into W0/b0): 784 -> 100 (padded 128), f32 accumulate.
    h1 = jnp.dot(xb, w0_ref[...], preferred_element_type=jnp.float32)
    h1 = jnp.maximum(h1 + b0_ref[...], 0.0)

    # fc1 (BN2 folded into W1/b1): 100 -> 50 (padded 128 -> 128), ReLU.
    h2 = jnp.dot(h1.astype(jnp.bfloat16), w1_ref[...],
                 preferred_element_type=jnp.float32)
    h2 = jnp.maximum(h2 + b1_ref[...], 0.0)

    # fc2: 50 -> 10 (padded 128 -> 128).
    logits = jnp.dot(h2.astype(jnp.bfloat16), w2_ref[...],
                     preferred_element_type=jnp.float32) + b2_ref[...]

    # Mask the padded class lanes, then numerically-stable log-softmax.
    lane = jax.lax.broadcasted_iota(jnp.int32, logits.shape, 1)
    logits = jnp.where(lane < num_classes, logits, jnp.float32(-1e30))
    m = jnp.max(logits, axis=-1, keepdims=True)
    lse = m + jnp.log(jnp.sum(jnp.exp(logits - m), axis=-1, keepdims=True))
    out_ref[...] = (logits - lse).astype(out_ref.dtype)


def prepare_params(p):
    """One-time param prep: fold BatchNorms into the Linears, pad, cast.

    p['w*'] are (in_features, out_features); BN params are running stats +
    affine (gamma/beta/mean/var), applied inference-style.
    """
    s1 = (p["gamma1"] * jax.lax.rsqrt(p["var1"] + EPS)).astype(jnp.float32)
    t1 = (p["beta1"] - p["mean1"] * s1).astype(jnp.float32)
    s2 = (p["gamma2"] * jax.lax.rsqrt(p["var2"] + EPS)).astype(jnp.float32)
    t2 = (p["beta2"] - p["mean2"] * s2).astype(jnp.float32)

    w0 = p["w0"].astype(jnp.float32)
    w1 = p["w1"].astype(jnp.float32)
    w2 = p["w2"].astype(jnp.float32)

    w0f = s1[:, None] * w0                      # BN1 folded into fc0
    b0f = t1 @ w0 + p["b0"].astype(jnp.float32)
    w1f = s2[:, None] * w1                      # BN2 folded into fc1
    b1f = t2 @ w1 + p["b1"].astype(jnp.float32)

    return dict(
        w0=_pad2(w0f, IMAGE_SIZE, H_PAD).astype(jnp.bfloat16),
        b0=jnp.pad(b0f, (0, H_PAD - H1)).astype(jnp.float32)[None, :],
        w1=_pad2(w1f, H_PAD, H_PAD).astype(jnp.bfloat16),
        b1=jnp.pad(b1f, (0, H_PAD - H2)).astype(jnp.float32)[None, :],
        w2=_pad2(w2, H_PAD, C_PAD).astype(jnp.bfloat16),
        b2=jnp.pad(p["b2"].astype(jnp.float32),
                   (0, C_PAD - NUM_CLASSES))[None, :],
    )


def mlp_forward(x, prepared, *, tm=1024):
    """Forward pass of module D as a single fused Pallas kernel.

    `prepared` comes from `prepare_params` (call once, reuse).
    Returns (N, 10) float32 log-probabilities.
    """
    n = x.shape[0]
    x2 = x.reshape(n, IMAGE_SIZE)

    # Pad the batch only to the 8-row sublane granule (no-op for N % 8 == 0).
    n_p = _round_up(n, 8)
    if n_p != n:
        x2 = jnp.pad(x2, ((0, n_p - n), (0, 0)))

    # Batch-only tiling; ragged last block handled by the cdiv grid.
    tm_eff = _round_up(max(8, min(tm, n_p)), 8)
    if pl.cdiv(n_p, tm_eff) == 1 and n_p >= 16:
        # Guarantee >=2 grid steps so the 'parallel' axis can shard across
        # both TensorCores on v7x (near-zero cost on v5e/v6e).
        tm_eff = _round_up(pl.cdiv(n_p, 2), 8)
    grid = (pl.cdiv(n_p, tm_eff),)

    const = lambda i: (0, 0)   # weights / biases: VMEM-resident, never re-fetched

    out = pl.pallas_call(
        functools.partial(_fused_mlp_kernel, num_classes=NUM_CLASSES),
        out_shape=jax.ShapeDtypeStruct((n_p, C_PAD), jnp.bfloat16),
        grid_spec=pltpu.PrefetchScalarGridSpec(
            num_scalar_prefetch=0,
            grid=grid,
            in_specs=[
                pl.BlockSpec((tm_eff, IMAGE_SIZE), lambda i: (i, 0)),  # x tile
                pl.BlockSpec((IMAGE_SIZE, H_PAD), const),  # W0 (BN1 folded)
                pl.BlockSpec((1, H_PAD), const),           # b0
                pl.BlockSpec((H_PAD, H_PAD), const),       # W1 (BN2 folded)
                pl.BlockSpec((1, H_PAD), const),           # b1
                pl.BlockSpec((H_PAD, C_PAD), const),       # W2
                pl.BlockSpec((1, C_PAD), const),           # b2
            ],
            out_specs=pl.BlockSpec((tm_eff, C_PAD), lambda i: (i, 0)),
        ),
        compiler_params=pltpu.CompilerParams(
            dimension_semantics=("parallel",),
            # Headroom for tm=1024 double-buffered f32 x tiles (v5e's scoped
            # default is 16 MiB); actual usage ~12 MB, well under v7x's 64 MiB.
            vmem_limit_bytes=48 * 1024 * 1024,
        ),
    )(x2, prepared["w0"], prepared["b0"], prepared["w1"], prepared["b1"],
      prepared["w2"], prepared["b2"])

    # Tiny slice/cast; the heavy HBM writeback above stays bf16 & lane-dense.
    return out[:n, :NUM_CLASSES].astype(jnp.float32)


def reference_forward(x, p):
    """Pure-JAX f32 reference of the same forward pass (inference-mode BN)."""
    x = x.reshape(-1, IMAGE_SIZE).astype(jnp.float32)
    s1 = p["gamma1"] / jnp.sqrt(p["var1"] + EPS)
    x = (x - p["mean1"]) * s1 + p["beta1"]
    h = jnp.maximum(x @ p["w0"] + p["b0"], 0.0)
    s2 = p["gamma2"] / jnp.sqrt(p["var2"] + EPS)
    h = (h - p["mean2"]) * s2 + p["beta2"]
    h = jnp.maximum(h @ p["w1"] + p["b1"], 0.0)
    logits = h @ p["w2"] + p["b2"]
    return jax.nn.log_softmax(logits, axis=-1)


if __name__ == "__main__":
    key = jax.random.PRNGKey(0)
    ks = jax.random.split(key, 16)

    batch = 16
    x = jax.random.normal(ks[0], (batch, 1, 28, 28), dtype=jnp.float32)

    def linear_init(kw, kb, fan_in, fan_out):
        bound = 1.0 / np.sqrt(fan_in)
        w = jax.random.uniform(kw, (fan_in, fan_out), jnp.float32, -bound, bound)
        b = jax.random.uniform(kb, (fan_out,), jnp.float32, -bound, bound)
        return w, b

    w0, b0 = linear_init(ks[1], ks[2], IMAGE_SIZE, H1)
    w1, b1 = linear_init(ks[3], ks[4], H1, H2)
    w2, b2 = linear_init(ks[5], ks[6], H2, NUM_CLASSES)

    params = dict(
        w0=w0, b0=b0, w1=w1, b1=b1, w2=w2, b2=b2,
        gamma1=1.0 + 0.1 * jax.random.normal(ks[7], (IMAGE_SIZE,), jnp.float32),
        beta1=0.1 * jax.random.normal(ks[8], (IMAGE_SIZE,), jnp.float32),
        mean1=0.1 * jax.random.normal(ks[9], (IMAGE_SIZE,), jnp.float32),
        var1=1.0 + 0.1 * jax.random.uniform(ks[10], (IMAGE_SIZE,), jnp.float32),
        gamma2=1.0 + 0.1 * jax.random.normal(ks[11], (H1,), jnp.float32),
        beta2=0.1 * jax.random.normal(ks[12], (H1,), jnp.float32),
        mean2=0.1 * jax.random.normal(ks[13], (H1,), jnp.float32),
        var2=1.0 + 0.1 * jax.random.uniform(ks[14], (H1,), jnp.float32),
    )

    # One-time parameter preparation (BN folding, padding, bf16 casts).
    prepared = jax.tree_util.tree_map(jax.block_until_ready,
                                      prepare_params(params))

    fwd = jax.jit(mlp_forward)
    out = jax.block_until_ready(fwd(x, prepared))
    ref = jax.block_until_ready(reference_forward(x, params))

    assert out.shape == (batch, NUM_CLASSES), out.shape
    err = float(jnp.max(jnp.abs(out - ref)))
    if not np.isfinite(err) or err > 5e-2:
        raise AssertionError(f"mismatch vs reference: max abs err = {err}")
    print("KERNEL_OK")
</pallas_src>

<mosaic_0001>
module attributes {stable_mosaic.version = 11 : i64} {
  func.func @_fused_mlp_kernel(%arg0: i32, %arg1: memref<8x784xf32, #tpu.memory_space<vmem>>, %arg2: memref<784x128xbf16, #tpu.memory_space<vmem>>, %arg3: memref<1x128xf32, #tpu.memory_space<vmem>>, %arg4: memref<128x128xbf16, #tpu.memory_space<vmem>>, %arg5: memref<1x128xf32, #tpu.memory_space<vmem>>, %arg6: memref<128x128xbf16, #tpu.memory_space<vmem>>, %arg7: memref<1x128xf32, #tpu.memory_space<vmem>>, %arg8: memref<8x128xbf16, #tpu.memory_space<vmem>>) attributes {dimension_semantics = [#tpu.dimension_semantics<parallel>], iteration_bounds = array<i64: 2>, scalar_prefetch = 0 : i64, scratch_operands = 0 : i64, tpu.core_type = #tpu.core_type<tc>, window_params = [{transform_indices = @transform_0, window_bounds = array<i64: 8, 784>}, {pipeline_mode = #tpu.pipeline_mode<synchronous>, transform_indices = @transform_1, window_bounds = array<i64: 784, 128>}, {pipeline_mode = #tpu.pipeline_mode<synchronous>, transform_indices = @transform_2, window_bounds = array<i64: 1, 128>}, {pipeline_mode = #tpu.pipeline_mode<synchronous>, transform_indices = @transform_3, window_bounds = array<i64: 128, 128>}, {pipeline_mode = #tpu.pipeline_mode<synchronous>, transform_indices = @transform_4, window_bounds = array<i64: 1, 128>}, {pipeline_mode = #tpu.pipeline_mode<synchronous>, transform_indices = @transform_5, window_bounds = array<i64: 128, 128>}, {pipeline_mode = #tpu.pipeline_mode<synchronous>, transform_indices = @transform_6, window_bounds = array<i64: 1, 128>}, {transform_indices = @transform_7, window_bounds = array<i64: 8, 128>}]} {
    %c0 = arith.constant 0 : index
    %c0_0 = arith.constant 0 : index
    %0 = vector.load %arg1[%c0, %c0_0] : memref<8x784xf32, #tpu.memory_space<vmem>>, vector<8x784xf32>
    %1 = arith.truncf %0 : vector<8x784xf32> to vector<8x784xbf16>
    %c0_1 = arith.constant 0 : index
    %c0_2 = arith.constant 0 : index
    %2 = vector.load %arg2[%c0_1, %c0_2] : memref<784x128xbf16, #tpu.memory_space<vmem>>, vector<784x128xbf16>
    %cst = arith.constant dense<0.000000e+00> : vector<8x128xf32>
    %3 = tpu.matmul %1, %2, %cst {dimension_numbers = #tpu.dot_dimension_numbers<[1], [0], [0], [1], [0, 0, 1, 1], [], []>} : vector<8x784xbf16>, vector<784x128xbf16>, vector<8x128xf32> -> vector<8x128xf32>
    %c0_3 = arith.constant 0 : index
    %c0_4 = arith.constant 0 : index
    %4 = vector.load %arg3[%c0_3, %c0_4] : memref<1x128xf32, #tpu.memory_space<vmem>>, vector<1x128xf32>
    %5 = vector.broadcast %4 : vector<1x128xf32> to vector<8x128xf32>
    %6 = arith.addf %3, %5 : vector<8x128xf32>
    %cst_5 = arith.constant 0.000000e+00 : f32
    %7 = vector.broadcast %cst_5 : f32 to vector<8x128xf32>
    %8 = arith.maximumf %6, %7 : vector<8x128xf32>
    %9 = arith.truncf %8 : vector<8x128xf32> to vector<8x128xbf16>
    %c0_6 = arith.constant 0 : index
    %c0_7 = arith.constant 0 : index
    %10 = vector.load %arg4[%c0_6, %c0_7] : memref<128x128xbf16, #tpu.memory_space<vmem>>, vector<128x128xbf16>
    %cst_8 = arith.constant dense<0.000000e+00> : vector<8x128xf32>
    %11 = tpu.matmul %9, %10, %cst_8 {dimension_numbers = #tpu.dot_dimension_numbers<[1], [0], [0], [1], [0, 0, 1, 1], [], []>} : vector<8x128xbf16>, vector<128x128xbf16>, vector<8x128xf32> -> vector<8x128xf32>
    %c0_9 = arith.constant 0 : index
    %c0_10 = arith.constant 0 : index
    %12 = vector.load %arg5[%c0_9, %c0_10] : memref<1x128xf32, #tpu.memory_space<vmem>>, vector<1x128xf32>
    %13 = vector.broadcast %12 : vector<1x128xf32> to vector<8x128xf32>
    %14 = arith.addf %11, %13 : vector<8x128xf32>
    %cst_11 = arith.constant 0.000000e+00 : f32
    %15 = vector.broadcast %cst_11 : f32 to vector<8x128xf32>
    %16 = arith.maximumf %14, %15 : vector<8x128xf32>
    %17 = arith.truncf %16 : vector<8x128xf32> to vector<8x128xbf16>
    %c0_12 = arith.constant 0 : index
    %c0_13 = arith.constant 0 : index
    %18 = vector.load %arg6[%c0_12, %c0_13] : memref<128x128xbf16, #tpu.memory_space<vmem>>, vector<128x128xbf16>
    %cst_14 = arith.constant dense<0.000000e+00> : vector<8x128xf32>
    %19 = tpu.matmul %17, %18, %cst_14 {dimension_numbers = #tpu.dot_dimension_numbers<[1], [0], [0], [1], [0, 0, 1, 1], [], []>} : vector<8x128xbf16>, vector<128x128xbf16>, vector<8x128xf32> -> vector<8x128xf32>
    %c0_15 = arith.constant 0 : index
    %c0_16 = arith.constant 0 : index
    %20 = vector.load %arg7[%c0_15, %c0_16] : memref<1x128xf32, #tpu.memory_space<vmem>>, vector<1x128xf32>
    %21 = vector.broadcast %20 : vector<1x128xf32> to vector<8x128xf32>
    %22 = arith.addf %19, %21 : vector<8x128xf32>
    %23 = tpu.iota {dimensions = array<i32: 1>} : vector<8x128xi32>
    %c10_i32 = arith.constant 10 : i32
    %24 = vector.broadcast %c10_i32 : i32 to vector<8x128xi32>
    %25 = arith.cmpi slt, %23, %24 : vector<8x128xi32>
    %cst_17 = arith.constant -1.000000e+30 : f32
    %26 = vector.broadcast %cst_17 : f32 to vector<8x128xf32>
    %27 = arith.select %25, %22, %26 : vector<8x128xi1>, vector<8x128xf32>
    %cst_18 = arith.constant dense<0xFF800000> : vector<8xf32>
    %28 = vector.multi_reduction <maximumf>, %27, %cst_18 [1] : vector<8x128xf32> to vector<8xf32>
    %29 = vector.shape_cast %28 : vector<8xf32> to vector<8x1xf32>
    %30 = vector.broadcast %29 : vector<8x1xf32> to vector<8x128xf32>
    %31 = arith.subf %27, %30 : vector<8x128xf32>
    %32 = math.exp %31 : vector<8x128xf32>
    %cst_19 = arith.constant dense<0.000000e+00> : vector<8xf32>
    %33 = vector.multi_reduction <add>, %32, %cst_19 [1] : vector<8x128xf32> to vector<8xf32>
    %34 = vector.shape_cast %33 : vector<8xf32> to vector<8x1xf32>
    %35 = math.log %34 : vector<8x1xf32>
    %36 = arith.addf %29, %35 : vector<8x1xf32>
    %37 = vector.broadcast %36 : vector<8x1xf32> to vector<8x128xf32>
    %38 = arith.subf %27, %37 : vector<8x128xf32>
    %39 = arith.truncf %38 : vector<8x128xf32> to vector<8x128xbf16>
    %c0_20 = arith.constant 0 : index
    %c0_21 = arith.constant 0 : index
    %40 = vector.load %arg8[%c0_20, %c0_21] : memref<8x128xbf16, #tpu.memory_space<vmem>>, vector<8x128xbf16>
    tpu.vector_store %arg8[%c0_20, %c0_21], %39 {strides = array<i32>} : memref<8x128xbf16, #tpu.memory_space<vmem>>, vector<8x128xbf16>,
    return
  }
  func.func @transform_0(%arg0: i32) -> (i32, i32) {
    %c0_i32 = arith.constant 0 : i32
    %c0_i32_0 = arith.constant 0 : i32
    return %arg0, %c0_i32 : i32, i32
  }
  func.func @transform_1(%arg0: i32) -> (i32, i32) {
    %c0_i32 = arith.constant 0 : i32
    %c0_i32_0 = arith.constant 0 : i32
    %c0_i32_1 = arith.constant 0 : i32
    return %c0_i32, %c0_i32_0 : i32, i32
  }
  func.func @transform_2(%arg0: i32) -> (i32, i32) {
    %c0_i32 = arith.constant 0 : i32
    %c0_i32_0 = arith.constant 0 : i32
    %c0_i32_1 = arith.constant 0 : i32
    return %c0_i32, %c0_i32_0 : i32, i32
  }
  func.func @transform_3(%arg0: i32) -> (i32, i32) {
    %c0_i32 = arith.constant 0 : i32
    %c0_i32_0 = arith.constant 0 : i32
    %c0_i32_1 = arith.constant 0 : i32
    return %c0_i32, %c0_i32_0 : i32, i32
  }
  func.func @transform_4(%arg0: i32) -> (i32, i32) {
    %c0_i32 = arith.constant 0 : i32
    %c0_i32_0 = arith.constant 0 : i32
    %c0_i32_1 = arith.constant 0 : i32
    return %c0_i32, %c0_i32_0 : i32, i32
  }
  func.func @transform_5(%arg0: i32) -> (i32, i32) {
    %c0_i32 = arith.constant 0 : i32
    %c0_i32_0 = arith.constant 0 : i32
    %c0_i32_1 = arith.constant 0 : i32
    return %c0_i32, %c0_i32_0 : i32, i32
  }
  func.func @transform_6(%arg0: i32) -> (i32, i32) {
    %c0_i32 = arith.constant 0 : i32
    %c0_i32_0 = arith.constant 0 : i32
    %c0_i32_1 = arith.constant 0 : i32
    return %c0_i32, %c0_i32_0 : i32, i32
  }
  func.func @transform_7(%arg0: i32) -> (i32, i32) {
    %c0_i32 = arith.constant 0 : i32
    %c0_i32_0 = arith.constant 0 : i32
    return %arg0, %c0_i32 : i32, i32
  }
}

</mosaic_0001>

<llo_original>
// kernel: mlp_forward.1
$region0: #{mlp_forward.1}
  #allocation0 [shape = 'u32[]', space=smem, size = 0x4, offset = 0x4, fixed_abs, tag = 'smem constant byte address 0x4 - core index']
  #allocation1 [shape = 'u32[144,128]{1,0:T(1,128)}', space=vmem, size = 0x12000, scoped, tag = 'internal scratch']
  %s0 = inlined_call_operand.vmem [shape: f32[16,784], index: 0, kind: input, shape index: {}]
  %s1 = inlined_call_operand.vmem [shape: bf16[784,128], index: 1, kind: input, shape index: {}]
  %s2 = inlined_call_operand.vmem [shape: f32[1,128], index: 2, kind: input, shape index: {}]
  %s3 = inlined_call_operand.vmem [shape: bf16[128,128], index: 3, kind: input, shape index: {}]
  %s4 = inlined_call_operand.vmem [shape: f32[1,128], index: 4, kind: input, shape index: {}]
  %s5 = inlined_call_operand.vmem [shape: bf16[128,128], index: 5, kind: input, shape index: {}]
  %s6 = inlined_call_operand.vmem [shape: f32[1,128], index: 6, kind: input, shape index: {}]
  %s7 = inlined_call_operand.vmem [shape: bf16[16,128], index: 7, kind: output, shape index: {}]
  %s8 = sld [smem:[#allocation0]]
  $region61: #{mlp_forward.1} parent=0
    _
  %s10 = ssub.s32 1, %s8
  %s11 = scalar_select 0, %s10, %s8
  loop: start=0, step=1, limit=4
  $region2: #{mlp_forward.1} parent=0 // loop_pre_header
    _
  $region3: #{mlp_forward.1} parent=0 // loop_header
    %s13 = sphi 0, %s17
    %p14 = scmp.ge.s32.totalorder %s13, 4
    %s23 = sphi 0, %s25
    %s26 = sphi 0, %s23
    %s27 = sphi 0, %s26
    %s43 = sphi 0, %s27
    %s47 = sphi 0, %s47
    %s49 = sphi 0, %s47
    %s50 = sphi 0, %s49
    %s64 = sphi 0, %s50
    %s68 = sphi 0, %s68
    %s70 = sphi 0, %s68
    %s71 = sphi 0, %s70
    %s85 = sphi 0, %s71
    %s89 = sphi 0, %s89
    %s91 = sphi 0, %s89
    %s92 = sphi 0, %s91
    %s106 = sphi 0, %s92
    %s110 = sphi 0, %s110
    %s112 = sphi 0, %s110
    %s113 = sphi 0, %s112
    %s127 = sphi 0, %s113
    %s131 = sphi 0, %s131
    %s133 = sphi 0, %s131
    %s134 = sphi 0, %s133
    %s148 = sphi 0, %s134
    %s152 = sphi 0, %s152
    %s154 = sphi 0, %s152
    %s155 = sphi 0, %s154
    %s169 = sphi 0, %s155
    %s175 = sphi 0, %s177
    %s178 = sphi 0, %s175
    %s179 = sphi 0, %s178
    %s195 = sphi 0, %s179
  $region4: #{mlp_forward.1} parent=0 // loop_header_branch
    %16 = sbr.rel (%p14) target = $region8
  $region5: #{mlp_forward.1} parent=0 // loop_body
    %s18 = ssub.s32 %s13, 1
    %s19 = ssub.s32 %s13, 2
    %s20 = sadd.s32 %s13, 1
    %s21 = ssub.s32 %s13, %s20
    %p22 = scmp.eq.s32.totalorder %s21, 0
    %s24 = sadd.s32 %s23, 1
    %s25 = scalar_select %p22, %s23, %s24
    %p28 = pneg %p22
    %p29 = scmp.eq.s32.totalorder %s13, 1
    %p30 = por %p28, %p29
    %p31 = scmp.ne.s32.totalorder %s23, %s26
    %p32 = scmp.eq.s32.totalorder %s13, 0
    %p33 = por %p31, %p32
    %p34 = scmp.ne.s32.totalorder %s23, %s26
    %p35 = scmp.eq.s32.totalorder %s18, 1
    %p36 = por %p34, %p35
    %p37 = scmp.ne.s32.totalorder %s26, %s27
    %p38 = scmp.eq.s32.totalorder %s18, 0
    %p39 = por %p37, %p38
    %p40 = scmp.ne.s32.totalorder %s26, %s27
    %p41 = scmp.eq.s32.totalorder %s19, 1
    %p42 = por %p40, %p41
    %p44 = scmp.ne.s32.totalorder %s27, %s43
    %p45 = scmp.eq.s32.totalorder %s19, 0
    %p46 = por %p44, %p45
    %s48 = sadd.s32 %s47, 1
    %p51 = scmp.eq.s32.totalorder %s13, 1
    %p52 = scmp.ne.s32.totalorder %s47, %s49
    %p53 = scmp.eq.s32.totalorder %s13, 0
    %p54 = por %p52, %p53
    %p55 = scmp.ne.s32.totalorder %s47, %s49
    %p56 = scmp.eq.s32.totalorder %s18, 1
    %p57 = por %p55, %p56
    %p58 = scmp.ne.s32.totalorder %s49, %s50
    %p59 = scmp.eq.s32.totalorder %s18, 0
    %p60 = por %p58, %p59
    %p61 = scmp.ne.s32.totalorder %s49, %s50
    %p62 = scmp.eq.s32.totalorder %s19, 1
    %p63 = por %p61, %p62
    %p65 = scmp.ne.s32.totalorder %s50, %s64
    %p66 = scmp.eq.s32.totalorder %s19, 0
    %p67 = por %p65, %p66
    %s69 = sadd.s32 %s68, 1
    %p72 = scmp.eq.s32.totalorder %s13, 1
    %p73 = scmp.ne.s32.totalorder %s68, %s70
    %p74 = scmp.eq.s32.totalorder %s13, 0
    %p75 = por %p73, %p74
    %p76 = scmp.ne.s32.totalorder %s68, %s70
    %p77 = scmp.eq.s32.totalorder %s18, 1
    %p78 = por %p76, %p77
    %p79 = scmp.ne.s32.totalorder %s70, %s71
    %p80 = scmp.eq.s32.totalorder %s18, 0
    %p81 = por %p79, %p80
    %p82 = scmp.ne.s32.totalorder %s70, %s71
    %p83 = scmp.eq.s32.totalorder %s19, 1
    %p84 = por %p82, %p83
    %p86 = scmp.ne.s32.totalorder %s71, %s85
    %p87 = scmp.eq.s32.totalorder %s19, 0
    %p88 = por %p86, %p87
    %s90 = sadd.s32 %s89, 1
    %p93 = scmp.eq.s32.totalorder %s13, 1
    %p94 = scmp.ne.s32.totalorder %s89, %s91
    %p95 = scmp.eq.s32.totalorder %s13, 0
    %p96 = por %p94, %p95
    %p97 = scmp.ne.s32.totalorder %s89, %s91
    %p98 = scmp.eq.s32.totalorder %s18, 1
    %p99 = por %p97, %p98
    %p100 = scmp.ne.s32.totalorder %s91, %s92
    %p101 = scmp.eq.s32.totalorder %s18, 0
    %p102 = por %p100, %p101
    %p103 = scmp.ne.s32.totalorder %s91, %s92
    %p104 = scmp.eq.s32.totalorder %s19, 1
    %p105 = por %p103, %p104
    %p107 = scmp.ne.s32.totalorder %s92, %s106
    %p108 = scmp.eq.s32.totalorder %s19, 0
    %p109 = por %p107, %p108
    %s111 = sadd.s32 %s110, 1
    %p114 = scmp.eq.s32.totalorder %s13, 1
    %p115 = scmp.ne.s32.totalorder %s110, %s112
    %p116 = scmp.eq.s32.totalorder %s13, 0
    %p117 = por %p115, %p116
    %p118 = scmp.ne.s32.totalorder %s110, %s112
    %p119 = scmp.eq.s32.totalorder %s18, 1
    %p120 = por %p118, %p119
    %p121 = scmp.ne.s32.totalorder %s112, %s113
    %p122 = scmp.eq.s32.totalorder %s18, 0
    %p123 = por %p121, %p122
    %p124 = scmp.ne.s32.totalorder %s112, %s113
    %p125 = scmp.eq.s32.totalorder %s19, 1
    %p126 = por %p124, %p125
    %p128 = scmp.ne.s32.totalorder %s113, %s127
    %p129 = scmp.eq.s32.totalorder %s19, 0
    %p130 = por %p128, %p129
    %s132 = sadd.s32 %s131, 1
    %p135 = scmp.eq.s32.totalorder %s13, 1
    %p136 = scmp.ne.s32.totalorder %s131, %s133
    %p137 = scmp.eq.s32.totalorder %s13, 0
    %p138 = por %p136, %p137
    %p139 = scmp.ne.s32.totalorder %s131, %s133
    %p140 = scmp.eq.s32.totalorder %s18, 1
    %p141 = por %p139, %p140
    %p142 = scmp.ne.s32.totalorder %s133, %s134
    %p143 = scmp.eq.s32.totalorder %s18, 0
    %p144 = por %p142, %p143
    %p145 = scmp.ne.s32.totalorder %s133, %s134
    %p146 = scmp.eq.s32.totalorder %s19, 1
    %p147 = por %p145, %p146
    %p149 = scmp.ne.s32.totalorder %s134, %s148
    %p150 = scmp.eq.s32.totalorder %s19, 0
    %p151 = por %p149, %p150
    %s153 = sadd.s32 %s152, 1
    %p156 = scmp.eq.s32.totalorder %s13, 1
    %p157 = scmp.ne.s32.totalorder %s152, %s154
    %p158 = scmp.eq.s32.totalorder %s13, 0
    %p159 = por %p157, %p158
    %p160 = scmp.ne.s32.totalorder %s152, %s154
    %p161 = scmp.eq.s32.totalorder %s18, 1
    %p162 = por %p160, %p161
    %p163 = scmp.ne.s32.totalorder %s154, %s155
    %p164 = scmp.eq.s32.totalorder %s18, 0
    %p165 = por %p163, %p164
    %p166 = scmp.ne.s32.totalorder %s154, %s155
    %p167 = scmp.eq.s32.totalorder %s19, 1
    %p168 = por %p166, %p167
    %p170 = scmp.ne.s32.totalorder %s155, %s169
    %p171 = scmp.eq.s32.totalorder %s19, 0
    %p172 = por %p170, %p171
    %s173 = ssub.s32 %s13, %s20
    %p174 = scmp.eq.s32.totalorder %s173, 0
    %s176 = sadd.s32 %s175, 1
    %s177 = scalar_select %p174, %s175, %s176
    %p180 = pneg %p174
    %p181 = scmp.eq.s32.totalorder %s13, 1
    %p182 = por %p180, %p181
    %p183 = scmp.ne.s32.totalorder %s175, %s178
    %p184 = scmp.eq.s32.totalorder %s13, 0
    %p185 = por %p183, %p184
    %p186 = scmp.ne.s32.totalorder %s175, %s178
    %p187 = scmp.eq.s32.totalorder %s18, 1
    %p188 = por %p186, %p187
    %p189 = scmp.ne.s32.totalorder %s178, %s179
    %p190 = scmp.eq.s32.totalorder %s18, 0
    %p191 = por %p189, %p190
    %p192 = scmp.ne.s32.totalorder %s178, %s179
    %p193 = scmp.eq.s32.totalorder %s19, 1
    %p194 = por %p192, %p193
    %p196 = scmp.ne.s32.totalorder %s179, %s195
    %p197 = scmp.eq.s32.totalorder %s19, 0
    %p198 = por %p196, %p197
    %p199 = scmp.le.s32.totalorder 1, %s13
    %p200 = scmp.lt.s32.totalorder %s13, 3
    %p201 = pnand %p199, %p200
    %p202 = pneg %p201
    // Predicated region
    $region9: #{mlp_forward.1} parent=5 // pred_check
      _
    $region10: #{mlp_forward.1} parent=5 // pred_check_branch
      %204 = sbr.rel (%p201) target = $region12
    $region11: #{mlp_forward.1} parent=5 // pred_region
      %s205 = ssub.s32 %s13, 1
      // Predicated region
      $region13: #{mlp_forward.1} parent=11 // pred_check
        %p206 = pneg %p60
      $region14: #{mlp_forward.1} parent=11 // pred_check_branch
        %208 = sbr.rel (%p206) target = $region16
      $region15: #{mlp_forward.1} parent=11 // pred_region
        _
      $region16: #{mlp_forward.1} parent=11 // pred_fallthru
        _
      // Predicated region
      $region17: #{mlp_forward.1} parent=11 // pred_check
        %p209 = pneg %p81
      $region18: #{mlp_forward.1} parent=11 // pred_check_branch
        %211 = sbr.rel (%p209) target = $region20
      $region19: #{mlp_forward.1} parent=11 // pred_region
        _
      $region20: #{mlp_forward.1} parent=11 // pred_fallthru
        _
      // Predicated region
      $region21: #{mlp_forward.1} parent=11 // pred_check
        %p212 = pneg %p102
      $region22: #{mlp_forward.1} parent=11 // pred_check_branch
        %214 = sbr.rel (%p212) target = $region24
      $region23: #{mlp_forward.1} parent=11 // pred_region
        _
      $region24: #{mlp_forward.1} parent=11 // pred_fallthru
        _
      // Predicated region
      $region25: #{mlp_forward.1} parent=11 // pred_check
        %p215 = pneg %p123
      $region26: #{mlp_forward.1} parent=11 // pred_check_branch
        %217 = sbr.rel (%p215) target = $region28
      $region27: #{mlp_forward.1} parent=11 // pred_region
        _
      $region28: #{mlp_forward.1} parent=11 // pred_fallthru
        _
      // Predicated region
      $region29: #{mlp_forward.1} parent=11 // pred_check
        %p218 = pneg %p144
      $region30: #{mlp_forward.1} parent=11 // pred_check_branch
        %220 = sbr.rel (%p218) target = $region32
      $region31: #{mlp_forward.1} parent=11 // pred_region
        _
      $region32: #{mlp_forward.1} parent=11 // pred_fallthru
        _
      // Predicated region
      $region33: #{mlp_forward.1} parent=11 // pred_check
        %p221 = pneg %p165
      $region34: #{mlp_forward.1} parent=11 // pred_check_branch
        %223 = sbr.rel (%p221) target = $region36
      $region35: #{mlp_forward.1} parent=11 // pred_region
        _
      $region36: #{mlp_forward.1} parent=11 // pred_fallthru
        _
    $region12: #{mlp_forward.1} parent=5 // pred_fallthru
      _
    %p224 = scmp.lt.s32.totalorder %s13, 2
    // Predicated region
    $region37: #{mlp_forward.1} parent=5 // pred_check
      %p225 = pneg %p224
    $region38: #{mlp_forward.1} parent=5 // pred_check_branch
      %227 = sbr.rel (%p225) target = $region40
    $region39: #{mlp_forward.1} parent=5 // pred_region
      // Predicated region
      $region41: #{mlp_forward.1} parent=39 // pred_check
        %p228 = pneg %p33
      $region42: #{mlp_forward.1} parent=39 // pred_check_branch
        %230 = sbr.rel (%p228) target = $region44
      $region43: #{mlp_forward.1} parent=39 // pred_region
        %p231 = scmp.lt.s32.totalorder %s13, 1
        %s232 = scalar_select %p231, %s13, 1
        %s233 = smul.addr %s232, 7
        %s234 = smul.addr %s233, 8
        %s235 = scalar_lea.vmem %s0, %s234
      $region44: #{mlp_forward.1} parent=39 // pred_fallthru
        _
    $region40: #{mlp_forward.1} parent=5 // pred_fallthru
      _
    %p236 = scmp.le.s32.totalorder 1, %s13
    %p237 = scmp.lt.s32.totalorder %s13, 3
    %p238 = pnand %p236, %p237
    %p239 = pneg %p238
    // Predicated region
    $region45: #{mlp_forward.1} parent=5 // pred_check
      _
    $region46: #{mlp_forward.1} parent=5 // pred_check_branch
      %241 = sbr.rel (%p238) target = $region48
    $region47: #{mlp_forward.1} parent=5 // pred_region
      %s242 = ssub.s32 %s13, 1
      %p243 = scmp.lt.s32.totalorder %s18, 1
      %s244 = scalar_select %p243, %s18, 1
      %s245 = smul.addr %s244, 7
      %s246 = smul.addr %s245, 8
      %s247 = scalar_lea.vmem %s0, %s246
      %p248 = pneg %p39
      %p249 = pneg %p36
      %p250 = pneg %p60
      %p251 = pneg %p57
      %p252 = pneg %p81
      %p253 = pneg %p78
      %p254 = pneg %p102
      %p255 = pneg %p99
      %p256 = pneg %p123
      %p257 = pneg %p120
      %p258 = pneg %p144
      %p259 = pneg %p141
      %p260 = pneg %p165
      %p261 = pneg %p162
      %p262 = pneg %p191
      %p263 = pneg %p188
      %p264 = scmp.lt.s32.totalorder %s18, 1
      %s265 = scalar_select %p264, %s18, 1
      %s266 = smul.addr %s265, 4
      %s267 = scalar_lea.vmem %s7, %s266
      %p268 = scmp.lt.s32.totalorder %s18, 1
      %s269 = scalar_select %p268, %s18, 1
      %s270 = smul.addr %s269, 7
      %s271 = smul.addr %s270, 8
      %s272 = scalar_lea.vmem %s0, %s271
      %p273 = scmp.lt.s32.totalorder %s18, 1
      %s274 = scalar_select %p273, %s18, 1
      %s275 = smul.addr %s274, 4
      %s276 = scalar_lea.vmem %s7, %s275
      %v278 = vld [vmem:[%s272] sm:$0xff]
      %v279 = vld [vmem:[%s272 + $0x8] sm:$0xff]
      %v280 = vld [vmem:[%s272 + $0x10] sm:$0xff]
      %v281 = vld [vmem:[%s272 + $0x18] sm:$0xff]
      %v282 = vld [vmem:[%s272 + $0x20] sm:$0xff]
      %v283 = vld [vmem:[%s272 + $0x28] sm:$0xff]
      %v284 = vld [vmem:[%s272 + $0x30] sm:$0xff]
      %v285 = vpack.c.bf16 %v278, %v278
      %v286 = vpack.c.bf16 %v279, %v279
      %v287 = vpack.c.bf16 %v280, %v280
      %v288 = vpack.c.bf16 %v281, %v281
      %v289 = vpack.c.bf16 %v282, %v282
      %v290 = vpack.c.bf16 %v283, %v283
      %v291 = vpack.c.bf16 %v284, %v284
      %v292 = vld [vmem:[%s1] sm:$0xf]
      %v293 = vld [vmem:[%s1 + $0x4] sm:$0xf]
      %v294 = vld [vmem:[%s1 + $0x8] sm:$0xf]
      %v295 = vld [vmem:[%s1 + $0xc] sm:$0xf]
      %v296 = vld [vmem:[%s1 + $0x10] sm:$0xf]
      %v297 = vld [vmem:[%s1 + $0x14] sm:$0xf]
      %v298 = vld [vmem:[%s1 + $0x18] sm:$0xf]
      %v299 = vld [vmem:[%s1 + $0x1c] sm:$0xf]
      %v300 = vld [vmem:[%s1 + $0x20] sm:$0xf]
      %v301 = vld [vmem:[%s1 + $0x24] sm:$0xf]
      %v302 = vld [vmem:[%s1 + $0x28] sm:$0xf]
      %v303 = vld [vmem:[%s1 + $0x2c] sm:$0xf]
      %v304 = vld [vmem:[%s1 + $0x30] sm:$0xf]
      %v305 = vld [vmem:[%s1 + $0x34] sm:$0xf]
      %v306 = vld [vmem:[%s1 + $0x38] sm:$0xf]
      %v307 = vld [vmem:[%s1 + $0x3c] sm:$0xf]
      %v308 = vld [vmem:[%s1 + $0x40] sm:$0xf]
      %v309 = vld [vmem:[%s1 + $0x44] sm:$0xf]
      %v310 = vld [vmem:[%s1 + $0x48] sm:$0xf]
      %v311 = vld [vmem:[%s1 + $0x4c] sm:$0xf]
      %v312 = vld [vmem:[%s1 + $0x50] sm:$0xf]
      %v313 = vld [vmem:[%s1 + $0x54] sm:$0xf]
      %v314 = vld [vmem:[%s1 + $0x58] sm:$0xf]
      %v315 = vld [vmem:[%s1 + $0x5c] sm:$0xf]
      %v316 = vld [vmem:[%s1 + $0x60] sm:$0xf]
      %v317 = vld [vmem:[%s1 + $0x64] sm:$0xf]
      %v318 = vld [vmem:[%s1 + $0x68] sm:$0xf]
      %v319 = vld [vmem:[%s1 + $0x6c] sm:$0xf]
      %v320 = vld [vmem:[%s1 + $0x70] sm:$0xf]
      %v321 = vld [vmem:[%s1 + $0x74] sm:$0xf]
      %v322 = vld [vmem:[%s1 + $0x78] sm:$0xf]
      %v323 = vld [vmem:[%s1 + $0x7c] sm:$0xf]
      %v324 = vld [vmem:[%s1 + $0x80] sm:$0xf]
      %v325 = vld [vmem:[%s1 + $0x84] sm:$0xf]
      %v326 = vld [vmem:[%s1 + $0x88] sm:$0xf]
      %v327 = vld [vmem:[%s1 + $0x8c] sm:$0xf]
      %v328 = vld [vmem:[%s1 + $0x90] sm:$0xf]
      %v329 = vld [vmem:[%s1 + $0x94] sm:$0xf]
      %v330 = vld [vmem:[%s1 + $0x98] sm:$0xf]
      %v331 = vld [vmem:[%s1 + $0x9c] sm:$0xf]
      %v332 = vld [vmem:[%s1 + $0xa0] sm:$0xf]
      %v333 = vld [vmem:[%s1 + $0xa4] sm:$0xf]
      %v334 = vld [vmem:[%s1 + $0xa8] sm:$0xf]
      %v335 = vld [vmem:[%s1 + $0xac] sm:$0xf]
      %v336 = vld [vmem:[%s1 + $0xb0] sm:$0xf]
      %v337 = vld [vmem:[%s1 + $0xb4] sm:$0xf]
      %v338 = vld [vmem:[%s1 + $0xb8] sm:$0xf]
      %v339 = vld [vmem:[%s1 + $0xbc] sm:$0xf]
      %v340 = vld [vmem:[%s1 + $0xc0] sm:$0xf]
      %v341 = vld [vmem:[%s1 + $0xc4] sm:$0xf]
      %v342 = vld [vmem:[%s1 + $0xc8] sm:$0xf]
      %v343 = vld [vmem:[%s1 + $0xcc] sm:$0xf]
      %v344 = vld [vmem:[%s1 + $0xd0] sm:$0xf]
      %v345 = vld [vmem:[%s1 + $0xd4] sm:$0xf]
      %v346 = vld [vmem:[%s1 + $0xd8] sm:$0xf]
      %v347 = vld [vmem:[%s1 + $0xdc] sm:$0xf]
      %v348 = vld [vmem:[%s1 + $0xe0] sm:$0xf]
      %v349 = vld [vmem:[%s1 + $0xe4] sm:$0xf]
      %v350 = vld [vmem:[%s1 + $0xe8] sm:$0xf]
      %v351 = vld [vmem:[%s1 + $0xec] sm:$0xf]
      %v352 = vld [vmem:[%s1 + $0xf0] sm:$0xf]
      %v353 = vld [vmem:[%s1 + $0xf4] sm:$0xf]
      %v354 = vld [vmem:[%s1 + $0xf8] sm:$0xf]
      %v355 = vld [vmem:[%s1 + $0xfc] sm:$0xf]
      %v356 = vld [vmem:[%s1 + $0x100] sm:$0xf]
      %v357 = vld [vmem:[%s1 + $0x104] sm:$0xf]
      %v358 = vld [vmem:[%s1 + $0x108] sm:$0xf]
      %v359 = vld [vmem:[%s1 + $0x10c] sm:$0xf]
      %v360 = vld [vmem:[%s1 + $0x110] sm:$0xf]
      %v361 = vld [vmem:[%s1 + $0x114] sm:$0xf]
      %v362 = vld [vmem:[%s1 + $0x118] sm:$0xf]
      %v363 = vld [vmem:[%s1 + $0x11c] sm:$0xf]
      %v364 = vld [vmem:[%s1 + $0x120] sm:$0xf]
      %v365 = vld [vmem:[%s1 + $0x124] sm:$0xf]
      %v366 = vld [vmem:[%s1 + $0x128] sm:$0xf]
      %v367 = vld [vmem:[%s1 + $0x12c] sm:$0xf]
      %v368 = vld [vmem:[%s1 + $0x130] sm:$0xf]
      %v369 = vld [vmem:[%s1 + $0x134] sm:$0xf]
      %v370 = vld [vmem:[%s1 + $0x138] sm:$0xf]
      %v371 = vld [vmem:[%s1 + $0x13c] sm:$0xf]
      %v372 = vld [vmem:[%s1 + $0x140] sm:$0xf]
      %v373 = vld [vmem:[%s1 + $0x144] sm:$0xf]
      %v374 = vld [vmem:[%s1 + $0x148] sm:$0xf]
      %v375 = vld [vmem:[%s1 + $0x14c] sm:$0xf]
      %v376 = vld [vmem:[%s1 + $0x150] sm:$0xf]
      %v377 = vld [vmem:[%s1 + $0x154] sm:$0xf]
      %v378 = vld [vmem:[%s1 + $0x158] sm:$0xf]
      %v379 = vld [vmem:[%s1 + $0x15c] sm:$0xf]
      %v380 = vld [vmem:[%s1 + $0x160] sm:$0xf]
      %v381 = vld [vmem:[%s1 + $0x164] sm:$0xf]
      %v382 = vld [vmem:[%s1 + $0x168] sm:$0xf]
      %v383 = vld [vmem:[%s1 + $0x16c] sm:$0xf]
      %v384 = vld [vmem:[%s1 + $0x170] sm:$0xf]
      %v385 = vld [vmem:[%s1 + $0x174] sm:$0xf]
      %v386 = vld [vmem:[%s1 + $0x178] sm:$0xf]
      %v387 = vld [vmem:[%s1 + $0x17c] sm:$0xf]
      %v388 = vld [vmem:[%s1 + $0x180] sm:$0xf]
      %v389 = vld [vmem:[%s1 + $0x184] sm:$0xf]
      %v390 = vld [vmem:[%s2] sm:$0x1]
      %v392 = vlaneseq
      %v393 = vshrl.u32 %v392, 7
      %v394 = vsub.s32 0, %v393
      %v395 = vrot.slane %v390, %v394
      %v495 = vunpack.c.l.b16 %v292
      %v496 = vunpack.c.l.b16 %v293
      %v497 = vunpack.c.l.b16 %v294
      %v498 = vunpack.c.l.b16 %v295
      %v499 = vunpack.c.l.b16 %v296
      %v500 = vunpack.c.l.b16 %v297
      %v501 = vunpack.c.l.b16 %v298
      %v502 = vunpack.c.l.b16 %v299
      %v503 = vunpack.c.l.b16 %v300
      %v504 = vunpack.c.l.b16 %v301
      %v505 = vunpack.c.l.b16 %v302
      %v506 = vunpack.c.l.b16 %v303
      %v507 = vunpack.c.l.b16 %v304
      %v508 = vunpack.c.l.b16 %v305
      %v509 = vunpack.c.l.b16 %v306
      %v510 = vunpack.c.l.b16 %v307
      %v511 = vunpack.c.l.b16 %v308
      %v512 = vunpack.c.l.b16 %v309
      %v513 = vunpack.c.l.b16 %v310
      %v514 = vunpack.c.l.b16 %v311
      %v515 = vunpack.c.l.b16 %v312
      %v516 = vunpack.c.l.b16 %v313
      %v517 = vunpack.c.l.b16 %v314
      %v518 = vunpack.c.l.b16 %v315
      %v519 = vunpack.c.l.b16 %v316
      %v520 = vunpack.c.l.b16 %v317
      %v521 = vunpack.c.l.b16 %v318
      %v522 = vunpack.c.l.b16 %v319
      %v523 = vunpack.c.l.b16 %v320
      %v524 = vunpack.c.l.b16 %v321
      %v525 = vunpack.c.l.b16 %v322
      %v526 = vunpack.c.l.b16 %v323
      %v527 = vunpack.c.l.b16 %v324
      %v528 = vunpack.c.l.b16 %v325
      %v529 = vunpack.c.l.b16 %v326
      %v530 = vunpack.c.l.b16 %v327
      %v531 = vunpack.c.l.b16 %v328
      %v532 = vunpack.c.l.b16 %v329
      %v533 = vunpack.c.l.b16 %v330
      %v534 = vunpack.c.l.b16 %v331
      %v535 = vunpack.c.l.b16 %v332
      %v536 = vunpack.c.l.b16 %v333
      %v537 = vunpack.c.l.b16 %v334
      %v538 = vunpack.c.l.b16 %v335
      %v539 = vunpack.c.l.b16 %v336
      %v540 = vunpack.c.l.b16 %v337
      %v541 = vunpack.c.l.b16 %v338
      %v542 = vunpack.c.l.b16 %v339
      %v543 = vunpack.c.l.b16 %v340
      %v544 = vunpack.c.l.b16 %v341
      %v545 = vunpack.c.l.b16 %v342
      %v546 = vunpack.c.l.b16 %v343
      %v547 = vunpack.c.l.b16 %v344
      %v548 = vunpack.c.l.b16 %v345
      %v549 = vunpack.c.l.b16 %v346
      %v550 = vunpack.c.l.b16 %v347
      %v551 = vunpack.c.l.b16 %v348
      %v552 = vunpack.c.l.b16 %v349
      %v553 = vunpack.c.l.b16 %v350
      %v554 = vunpack.c.l.b16 %v351
      %v555 = vunpack.c.l.b16 %v352
      %v556 = vunpack.c.l.b16 %v353
      %v557 = vunpack.c.l.b16 %v354
      %v558 = vunpack.c.l.b16 %v355
      %v559 = vunpack.c.l.b16 %v356
      %v560 = vunpack.c.l.b16 %v357
      %v561 = vunpack.c.l.b16 %v358
      %v562 = vunpack.c.l.b16 %v359
      %v563 = vunpack.c.l.b16 %v360
      %v564 = vunpack.c.l.b16 %v361
      %v565 = vunpack.c.l.b16 %v362
      %v566 = vunpack.c.l.b16 %v363
      %v567 = vunpack.c.l.b16 %v364
      %v568 = vunpack.c.l.b16 %v365
      %v569 = vunpack.c.l.b16 %v366
      %v570 = vunpack.c.l.b16 %v367
      %v571 = vunpack.c.l.b16 %v368
      %v572 = vunpack.c.l.b16 %v369
      %v573 = vunpack.c.l.b16 %v370
      %v574 = vunpack.c.l.b16 %v371
      %v575 = vunpack.c.l.b16 %v372
      %v576 = vunpack.c.l.b16 %v373
      %v577 = vunpack.c.l.b16 %v374
      %v578 = vunpack.c.l.b16 %v375
      %v579 = vunpack.c.l.b16 %v376
      %v580 = vunpack.c.l.b16 %v377
      %v581 = vunpack.c.l.b16 %v378
      %v582 = vunpack.c.l.b16 %v379
      %v583 = vunpack.c.l.b16 %v380
      %v584 = vunpack.c.l.b16 %v381
      %v585 = vunpack.c.l.b16 %v382
      %v586 = vunpack.c.l.b16 %v383
      %v587 = vunpack.c.l.b16 %v384
      %v588 = vunpack.c.l.b16 %v385
      %v589 = vunpack.c.l.b16 %v386
      %v590 = vunpack.c.l.b16 %v387
      %v591 = vunpack.c.l.b16 %v388
      %v592 = vunpack.c.l.b16 %v389
      %v593 = vpack.c.b16 %v496, %v495
      %v594 = vpack.c.b16 %v498, %v497
      %v595 = vpack.c.b16 %v500, %v499
      %v596 = vpack.c.b16 %v502, %v501
      %v597 = vpack.c.b16 %v504, %v503
      %v598 = vpack.c.b16 %v506, %v505
      %v599 = vpack.c.b16 %v508, %v507
      %v600 = vpack.c.b16 %v510, %v509
      %v601 = vpack.c.b16 %v512, %v511
      %v602 = vpack.c.b16 %v514, %v513
      %v603 = vpack.c.b16 %v516, %v515
      %v604 = vpack.c.b16 %v518, %v517
      %v605 = vpack.c.b16 %v520, %v519
      %v606 = vpack.c.b16 %v522, %v521
      %v607 = vpack.c.b16 %v524, %v523
      %v608 = vpack.c.b16 %v526, %v525
      %v609 = vpack.c.b16 %v528, %v527
      %v610 = vpack.c.b16 %v530, %v529
      %v611 = vpack.c.b16 %v532, %v531
      %v612 = vpack.c.b16 %v534, %v533
      %v613 = vpack.c.b16 %v536, %v535
      %v614 = vpack.c.b16 %v538, %v537
      %v615 = vpack.c.b16 %v540, %v539
      %v616 = vpack.c.b16 %v542, %v541
      %v617 = vpack.c.b16 %v544, %v543
      %v618 = vpack.c.b16 %v546, %v545
      %v619 = vpack.c.b16 %v548, %v547
      %v620 = vpack.c.b16 %v550, %v549
      %v621 = vpack.c.b16 %v552, %v551
      %v622 = vpack.c.b16 %v554, %v553
      %v623 = vpack.c.b16 %v556, %v555
      %v624 = vpack.c.b16 %v558, %v557
      %v625 = vpack.c.b16 %v560, %v559
      %v626 = vpack.c.b16 %v562, %v561
      %v627 = vpack.c.b16 %v564, %v563
      %v628 = vpack.c.b16 %v566, %v565
      %v629 = vpack.c.b16 %v568, %v567
      %v630 = vpack.c.b16 %v570, %v569
      %v631 = vpack.c.b16 %v572, %v571
      %v632 = vpack.c.b16 %v574, %v573
      %v633 = vpack.c.b16 %v576, %v575
      %v634 = vpack.c.b16 %v578, %v577
      %v635 = vpack.c.b16 %v580, %v579
      %v636 = vpack.c.b16 %v582, %v581
      %v637 = vpack.c.b16 %v584, %v583
      %v638 = vpack.c.b16 %v586, %v585
      %v639 = vpack.c.b16 %v588, %v587
      %v640 = vpack.c.b16 %v590, %v589
      %v641 = vpack.c.b16 %v592, %v591
      %vm691 = vcmask 130048
      %v693 = vsel %vm691, %v291, 0
      %695 = vmatprep.subr.bf16.mxu0 0
      %696 = vmatpush1.bf16.msra.mxu0 %v600
      %697 = vmatprep.subr.bf16.mxu0 0
      %698 = vmatpush1.bf16.msra.mxu0 %v599
      %699 = vmatprep.subr.bf16.mxu0 0
      %700 = vmatpush1.bf16.msra.mxu0 %v598
      %701 = vmatprep.subr.bf16.mxu0 0
      %702 = vmatpush1.bf16.msra.mxu0 %v597
      %703 = vmatprep.subr.bf16.mxu0 0
      %704 = vmatpush1.bf16.msra.mxu0 %v596
      %705 = vmatprep.subr.bf16.mxu0 0
      %706 = vmatpush1.bf16.msra.mxu0 %v595
      %707 = vmatprep.subr.bf16.mxu0 0
      %708 = vmatpush1.bf16.msra.mxu0 %v594
      %709 = vmatprep.subr.bf16.mxu0 0
      %710 = vmatpush1.bf16.msra.mxu0 %v593
      %711 = vmatprep.subr.bf16.mxu0 0
      %712 = vmatpush2.bf16.msra.mxu0 %v608
      %713 = vmatprep.subr.bf16.mxu0 0
      %714 = vmatpush2.bf16.msra.mxu0 %v607
      %715 = vmatprep.subr.bf16.mxu0 0
      %716 = vmatpush2.bf16.msra.mxu0 %v606
      %717 = vmatprep.subr.bf16.mxu0 0
      %718 = vmatpush2.bf16.msra.mxu0 %v605
      %719 = vmatprep.subr.bf16.mxu0 0
      %720 = vmatpush2.bf16.msra.mxu0 %v604
      %721 = vmatprep.subr.bf16.mxu0 0
      %722 = vmatpush2.bf16.msra.mxu0 %v603
      %723 = vmatprep.subr.bf16.mxu0 0
      %724 = vmatpush2.bf16.msra.mxu0 %v602
      %725 = vmatprep.subr.bf16.mxu0 0
      %726 = vmatpush2.bf16.msra.mxu0 %v601
      %727 = vmatprep.mubr.bf16.mxu0 %v286
      %728 = vmatmul.mubr.bf16.gmra.mxu0 %v285
      %v729 = vpop.f32.mrf.mxu0
      %v730 = vadd.f32 %v395, %v729
      %v731 = vpop.f32.mrf.mxu0
      %v732 = vpop.f32.mrf.mxu0
      %v733 = vpop.f32.mrf.mxu0
      %734 = vdwg.mxu0
      %735 = vmatprep.subr.bf16.mxu0 0
      %736 = vmatpush1.bf16.msra.mxu0 %v616
      %737 = vmatprep.subr.bf16.mxu0 0
      %738 = vmatpush1.bf16.msra.mxu0 %v615
      %739 = vmatprep.subr.bf16.mxu0 0
      %740 = vmatpush1.bf16.msra.mxu0 %v614
      %741 = vmatprep.subr.bf16.mxu0 0
      %742 = vmatpush1.bf16.msra.mxu0 %v613
      %743 = vmatprep.subr.bf16.mxu0 0
      %744 = vmatpush1.bf16.msra.mxu0 %v612
      %745 = vmatprep.subr.bf16.mxu0 0
      %746 = vmatpush1.bf16.msra.mxu0 %v611
      %747 = vmatprep.subr.bf16.mxu0 0
      %748 = vmatpush1.bf16.msra.mxu0 %v610
      %749 = vmatprep.subr.bf16.mxu0 0
      %750 = vmatpush1.bf16.msra.mxu0 %v609
      %751 = vmatprep.subr.bf16.mxu0 0
      %752 = vmatpush2.bf16.msra.mxu0 %v624
      %753 = vmatprep.subr.bf16.mxu0 0
      %754 = vmatpush2.bf16.msra.mxu0 %v623
      %755 = vmatprep.subr.bf16.mxu0 0
      %756 = vmatpush2.bf16.msra.mxu0 %v622
      %757 = vmatprep.subr.bf16.mxu0 0
      %758 = vmatpush2.bf16.msra.mxu0 %v621
      %759 = vmatprep.subr.bf16.mxu0 0
      %760 = vmatpush2.bf16.msra.mxu0 %v620
      %761 = vmatprep.subr.bf16.mxu0 0
      %762 = vmatpush2.bf16.msra.mxu0 %v619
      %763 = vmatprep.subr.bf16.mxu0 0
      %764 = vmatpush2.bf16.msra.mxu0 %v618
      %765 = vmatprep.subr.bf16.mxu0 0
      %766 = vmatpush2.bf16.msra.mxu0 %v617
      %767 = vmatprep.mubr.bf16.mxu0 %v288
      %768 = vmatmul.mubr.bf16.gmra.mxu0 %v287
      %v769 = vpop.f32.mrf.mxu0
      %v770 = vadd.f32 %v730, %v769
      %v771 = vpop.f32.mrf.mxu0
      %v772 = vpop.f32.mrf.mxu0
      %v773 = vpop.f32.mrf.mxu0
      %774 = vdwg.mxu0
      %775 = vmatprep.subr.bf16.mxu0 0
      %776 = vmatpush1.bf16.msra.mxu0 %v632
      %777 = vmatprep.subr.bf16.mxu0 0
      %778 = vmatpush1.bf16.msra.mxu0 %v631
      %779 = vmatprep.subr.bf16.mxu0 0
      %780 = vmatpush1.bf16.msra.mxu0 %v630
      %781 = vmatprep.subr.bf16.mxu0 0
      %782 = vmatpush1.bf16.msra.mxu0 %v629
      %783 = vmatprep.subr.bf16.mxu0 0
      %784 = vmatpush1.bf16.msra.mxu0 %v628
      %785 = vmatprep.subr.bf16.mxu0 0
      %786 = vmatpush1.bf16.msra.mxu0 %v627
      %787 = vmatprep.subr.bf16.mxu0 0
      %788 = vmatpush1.bf16.msra.mxu0 %v626
      %789 = vmatprep.subr.bf16.mxu0 0
      %790 = vmatpush1.bf16.msra.mxu0 %v625
      %791 = vmatprep.subr.bf16.mxu0 0
      %792 = vmatpush2.bf16.msra.mxu0 %v640
      %793 = vmatprep.subr.bf16.mxu0 0
      %794 = vmatpush2.bf16.msra.mxu0 %v639
      %795 = vmatprep.subr.bf16.mxu0 0
      %796 = vmatpush2.bf16.msra.mxu0 %v638
      %797 = vmatprep.subr.bf16.mxu0 0
      %798 = vmatpush2.bf16.msra.mxu0 %v637
      %799 = vmatprep.subr.bf16.mxu0 0
      %800 = vmatpush2.bf16.msra.mxu0 %v636
      %801 = vmatprep.subr.bf16.mxu0 0
      %802 = vmatpush2.bf16.msra.mxu0 %v635
      %803 = vmatprep.subr.bf16.mxu0 0
      %804 = vmatpush2.bf16.msra.mxu0 %v634
      %805 = vmatprep.subr.bf16.mxu0 0
      %806 = vmatpush2.bf16.msra.mxu0 %v633
      %807 = vmatprep.mubr.bf16.mxu0 %v290
      %808 = vmatmul.mubr.bf16.gmra.mxu0 %v289
      %v809 = vpop.f32.mrf.mxu0
      %v810 = vadd.f32 %v770, %v809
      %v811 = vpop.f32.mrf.mxu0
      %v812 = vpop.f32.mrf.mxu0
      %v813 = vpop.f32.mrf.mxu0
      %814 = vdwg.mxu0
      %815 = vmatprep.subr.bf16.mxu0 0
      %816 = vmatpush1.bf16.msra.mxu0 0
      %817 = vmatprep.subr.bf16.mxu0 0
      %818 = vmatpush1.bf16.msra.mxu0 0
      %819 = vmatprep.subr.bf16.mxu0 0
      %820 = vmatpush1.bf16.msra.mxu0 0
      %821 = vmatprep.subr.bf16.mxu0 0
      %822 = vmatpush1.bf16.msra.mxu0 0
      %823 = vmatprep.subr.bf16.mxu0 0
      %824 = vmatpush1.bf16.msra.mxu0 0
      %825 = vmatprep.subr.bf16.mxu0 0
      %826 = vmatpush1.bf16.msra.mxu0 0
      %827 = vmatprep.subr.bf16.mxu0 0
      %828 = vmatpush1.bf16.msra.mxu0 0
      %829 = vmatprep.subr.bf16.mxu0 0
      %830 = vmatpush1.bf16.msra.mxu0 %v641
      %831 = vmatprep.subr.bf16.mxu0 0
      %832 = vmatpush2.bf16.msra.mxu0 0
      %833 = vmatprep.subr.bf16.mxu0 0
      %834 = vmatpush2.bf16.msra.mxu0 0
      %835 = vmatprep.subr.bf16.mxu0 0
      %836 = vmatpush2.bf16.msra.mxu0 0
      %837 = vmatprep.subr.bf16.mxu0 0
      %838 = vmatpush2.bf16.msra.mxu0 0
      %839 = vmatprep.subr.bf16.mxu0 0
      %840 = vmatpush2.bf16.msra.mxu0 0
      %841 = vmatprep.subr.bf16.mxu0 0
      %842 = vmatpush2.bf16.msra.mxu0 0
      %843 = vmatprep.subr.bf16.mxu0 0
      %844 = vmatpush2.bf16.msra.mxu0 0
      %845 = vmatprep.subr.bf16.mxu0 0
      %846 = vmatpush2.bf16.msra.mxu0 0
      %847 = vmatprep.mubr.bf16.mxu0 0
      %848 = vmatmul.mubr.bf16.gmra.mxu0 %v693
      %v849 = vpop.f32.mrf.mxu0
      %v850 = vadd.f32 %v810, %v849
      %v851 = vpop.f32.mrf.mxu0
      %v852 = vpop.f32.mrf.mxu0
      %v853 = vpop.f32.mrf.mxu0
      %854 = vdwg.mxu0
      %v855 = vmax.f32 %v850, 0.0
      %v856 = vpack.c.bf16 %v855, %v855
      %v857 = vld [vmem:[%s3] sm:$0xf]
      %v858 = vld [vmem:[%s3 + $0x4] sm:$0xf]
      %v859 = vld [vmem:[%s3 + $0x8] sm:$0xf]
      %v860 = vld [vmem:[%s3 + $0xc] sm:$0xf]
      %v861 = vld [vmem:[%s3 + $0x10] sm:$0xf]
      %v862 = vld [vmem:[%s3 + $0x14] sm:$0xf]
      %v863 = vld [vmem:[%s3 + $0x18] sm:$0xf]
      %v864 = vld [vmem:[%s3 + $0x1c] sm:$0xf]
      %v865 = vld [vmem:[%s3 + $0x20] sm:$0xf]
      %v866 = vld [vmem:[%s3 + $0x24] sm:$0xf]
      %v867 = vld [vmem:[%s3 + $0x28] sm:$0xf]
      %v868 = vld [vmem:[%s3 + $0x2c] sm:$0xf]
      %v869 = vld [vmem:[%s3 + $0x30] sm:$0xf]
      %v870 = vld [vmem:[%s3 + $0x34] sm:$0xf]
      %v871 = vld [vmem:[%s3 + $0x38] sm:$0xf]
      %v872 = vld [vmem:[%s3 + $0x3c] sm:$0xf]
      %v873 = vld [vmem:[%s4] sm:$0x1]
      %v875 = vlaneseq
      %v876 = vshrl.u32 %v875, 7
      %v877 = vsub.s32 0, %v876
      %v878 = vrot.slane %v873, %v877
      %v896 = vunpack.c.l.b16 %v857
      %v897 = vunpack.c.l.b16 %v858
      %v898 = vunpack.c.l.b16 %v859
      %v899 = vunpack.c.l.b16 %v860
      %v900 = vunpack.c.l.b16 %v861
      %v901 = vunpack.c.l.b16 %v862
      %v902 = vunpack.c.l.b16 %v863
      %v903 = vunpack.c.l.b16 %v864
      %v904 = vunpack.c.l.b16 %v865
      %v905 = vunpack.c.l.b16 %v866
      %v906 = vunpack.c.l.b16 %v867
      %v907 = vunpack.c.l.b16 %v868
      %v908 = vunpack.c.l.b16 %v869
      %v909 = vunpack.c.l.b16 %v870
      %v910 = vunpack.c.l.b16 %v871
      %v911 = vunpack.c.l.b16 %v872
      %v912 = vpack.c.b16 %v897, %v896
      %v913 = vpack.c.b16 %v899, %v898
      %v914 = vpack.c.b16 %v901, %v900
      %v915 = vpack.c.b16 %v903, %v902
      %v916 = vpack.c.b16 %v905, %v904
      %v917 = vpack.c.b16 %v907, %v906
      %v918 = vpack.c.b16 %v909, %v908
      %v919 = vpack.c.b16 %v911, %v910
      %928 = vmatprep.subr.bf16.mxu0 0
      %929 = vmatpush1.bf16.msra.mxu0 %v919
      %930 = vmatprep.subr.bf16.mxu0 0
      %931 = vmatpush1.bf16.msra.mxu0 %v918
      %932 = vmatprep.subr.bf16.mxu0 0
      %933 = vmatpush1.bf16.msra.mxu0 %v917
      %934 = vmatprep.subr.bf16.mxu0 0
      %935 = vmatpush1.bf16.msra.mxu0 %v916
      %936 = vmatprep.subr.bf16.mxu0 0
      %937 = vmatpush1.bf16.msra.mxu0 %v915
      %938 = vmatprep.subr.bf16.mxu0 0
      %939 = vmatpush1.bf16.msra.mxu0 %v914
      %940 = vmatprep.subr.bf16.mxu0 0
      %941 = vmatpush1.bf16.msra.mxu0 %v913
      %942 = vmatprep.subr.bf16.mxu0 0
      %943 = vmatpush1.bf16.msra.mxu0 %v912
      %944 = vmatprep.subr.bf16.mxu0 0
      %945 = vmatpush2.bf16.msra.mxu0 0
      %946 = vmatprep.subr.bf16.mxu0 0
      %947 = vmatpush2.bf16.msra.mxu0 0
      %948 = vmatprep.subr.bf16.mxu0 0
      %949 = vmatpush2.bf16.msra.mxu0 0
      %950 = vmatprep.subr.bf16.mxu0 0
      %951 = vmatpush2.bf16.msra.mxu0 0
      %952 = vmatprep.subr.bf16.mxu0 0
      %953 = vmatpush2.bf16.msra.mxu0 0
      %954 = vmatprep.subr.bf16.mxu0 0
      %955 = vmatpush2.bf16.msra.mxu0 0
      %956 = vmatprep.subr.bf16.mxu0 0
      %957 = vmatpush2.bf16.msra.mxu0 0
      %958 = vmatprep.subr.bf16.mxu0 0
      %959 = vmatpush2.bf16.msra.mxu0 0
      %960 = vmatprep.mubr.bf16.mxu0 0
      %961 = vmatmul.mubr.bf16.gmra.mxu0 %v856
      %v962 = vpop.f32.mrf.mxu0
      %v963 = vadd.f32 %v878, %v962
      %v964 = vpop.f32.mrf.mxu0
      %v965 = vpop.f32.mrf.mxu0
      %v966 = vpop.f32.mrf.mxu0
      %967 = vdwg.mxu0
      %v968 = vmax.f32 %v963, 0.0
      %v969 = vpack.c.bf16 %v968, %v968
      %v970 = vld [vmem:[%s5] sm:$0xf]
      %v971 = vld [vmem:[%s5 + $0x4] sm:$0xf]
      %v972 = vld [vmem:[%s5 + $0x8] sm:$0xf]
      %v973 = vld [vmem:[%s5 + $0xc] sm:$0xf]
      %v974 = vld [vmem:[%s5 + $0x10] sm:$0xf]
      %v975 = vld [vmem:[%s5 + $0x14] sm:$0xf]
      %v976 = vld [vmem:[%s5 + $0x18] sm:$0xf]
      %v977 = vld [vmem:[%s5 + $0x1c] sm:$0xf]
      %v978 = vld [vmem:[%s5 + $0x20] sm:$0xf]
      %v979 = vld [vmem:[%s5 + $0x24] sm:$0xf]
      %v980 = vld [vmem:[%s5 + $0x28] sm:$0xf]
      %v981 = vld [vmem:[%s5 + $0x2c] sm:$0xf]
      %v982 = vld [vmem:[%s5 + $0x30] sm:$0xf]
      %v983 = vld [vmem:[%s5 + $0x34] sm:$0xf]
      %v984 = vld [vmem:[%s5 + $0x38] sm:$0xf]
      %v985 = vld [vmem:[%s5 + $0x3c] sm:$0xf]
      %v986 = vld [vmem:[%s6] sm:$0x1]
      %v988 = vlaneseq
      %v989 = vshrl.u32 %v988, 7
      %v990 = vsub.s32 0, %v989
      %v991 = vrot.slane %v986, %v990
      %v1009 = vunpack.c.l.b16 %v970
      %v1010 = vunpack.c.l.b16 %v971
      %v1011 = vunpack.c.l.b16 %v972
      %v1012 = vunpack.c.l.b16 %v973
      %v1013 = vunpack.c.l.b16 %v974
      %v1014 = vunpack.c.l.b16 %v975
      %v1015 = vunpack.c.l.b16 %v976
      %v1016 = vunpack.c.l.b16 %v977
      %v1017 = vunpack.c.l.b16 %v978
      %v1018 = vunpack.c.l.b16 %v979
      %v1019 = vunpack.c.l.b16 %v980
      %v1020 = vunpack.c.l.b16 %v981
      %v1021 = vunpack.c.l.b16 %v982
      %v1022 = vunpack.c.l.b16 %v983
      %v1023 = vunpack.c.l.b16 %v984
      %v1024 = vunpack.c.l.b16 %v985
      %v1025 = vpack.c.b16 %v1010, %v1009
      %v1026 = vpack.c.b16 %v1012, %v1011
      %v1027 = vpack.c.b16 %v1014, %v1013
      %v1028 = vpack.c.b16 %v1016, %v1015
      %v1029 = vpack.c.b16 %v1018, %v1017
      %v1030 = vpack.c.b16 %v1020, %v1019
      %v1031 = vpack.c.b16 %v1022, %v1021
      %v1032 = vpack.c.b16 %v1024, %v1023
      %1041 = vmatprep.subr.bf16.mxu0 0
      %1042 = vmatpush1.bf16.msra.mxu0 %v1032
      %1043 = vmatprep.subr.bf16.mxu0 0
      %1044 = vmatpush1.bf16.msra.mxu0 %v1031
      %1045 = vmatprep.subr.bf16.mxu0 0
      %1046 = vmatpush1.bf16.msra.mxu0 %v1030
      %1047 = vmatprep.subr.bf16.mxu0 0
      %1048 = vmatpush1.bf16.msra.mxu0 %v1029
      %1049 = vmatprep.subr.bf16.mxu0 0
      %1050 = vmatpush1.bf16.msra.mxu0 %v1028
      %1051 = vmatprep.subr.bf16.mxu0 0
      %1052 = vmatpush1.bf16.msra.mxu0 %v1027
      %1053 = vmatprep.subr.bf16.mxu0 0
      %1054 = vmatpush1.bf16.msra.mxu0 %v1026
      %1055 = vmatprep.subr.bf16.mxu0 0
      %1056 = vmatpush1.bf16.msra.mxu0 %v1025
      %1057 = vmatprep.subr.bf16.mxu0 0
      %1058 = vmatpush2.bf16.msra.mxu0 0
      %1059 = vmatprep.subr.bf16.mxu0 0
      %1060 = vmatpush2.bf16.msra.mxu0 0
      %1061 = vmatprep.subr.bf16.mxu0 0
      %1062 = vmatpush2.bf16.msra.mxu0 0
      %1063 = vmatprep.subr.bf16.mxu0 0
      %1064 = vmatpush2.bf16.msra.mxu0 0
      %1065 = vmatprep.subr.bf16.mxu0 0
      %1066 = vmatpush2.bf16.msra.mxu0 0
      %1067 = vmatprep.subr.bf16.mxu0 0
      %1068 = vmatpush2.bf16.msra.mxu0 0
      %1069 = vmatprep.subr.bf16.mxu0 0
      %1070 = vmatpush2.bf16.msra.mxu0 0
      %1071 = vmatprep.subr.bf16.mxu0 0
      %1072 = vmatpush2.bf16.msra.mxu0 0
      %1073 = vmatprep.mubr.bf16.mxu0 0
      %1074 = vmatmul.mubr.bf16.gmra.mxu0 %v969
      %v1075 = vpop.f32.mrf.mxu0
      %v1076 = vadd.f32 %v991, %v1075
      %v1077 = vpop.f32.mrf.mxu0
      %v1078 = vpop.f32.mrf.mxu0
      %v1079 = vpop.f32.mrf.mxu0
      %1080 = vdwg.mxu0
      %v1081 = vlaneseq
      %v1082 = vand.u32 %v1081, 127
      %vm1083 = vcmp.lt.s32.totalorder %v1082, 10
      %v1084 = vsel %vm1083, %v1076, -1e+30
      %1085 = vmax.xlane.f32.xlu0 %v1084
      %v1086 = vpop.xlane.xlu0 %1085
      %v1087 = vsub.f32 %v1084, %v1086
      %v1088 = vmul.f32 %v1087, 1.442695
      %v1089 = vpow.pop %v1088
      %1090 = vadd.xlane.f32.xlu0 %v1089
      %v1091 = vpop.xlane.xlu0 %1090
      %v1092 = vlog2.pop %v1091
      %v1093 = vmul.f32 %v1092, 0.6931472
      %v1094 = vadd.f32 %v1086, %v1093
      %v1095 = vsub.f32 %v1084, %v1094
      %v1096 = vpack.c.bf16 %v1095, %v1095
      %1097 = vst [vmem:[%s276] sm:$0xf] %v1096
      %p1098 = scmp.lt.s32.totalorder %s18, 1
      %s1099 = scalar_select %p1098, %s18, 1
      %s1100 = smul.addr %s1099, 4
      %s1101 = scalar_lea.vmem %s7, %s1100
      // Predicated region
      $region49: #{mlp_forward.1} parent=47 // pred_check
        %p1102 = pneg %p188
      $region50: #{mlp_forward.1} parent=47 // pred_check_branch
        %1104 = sbr.rel (%p1102) target = $region52
      $region51: #{mlp_forward.1} parent=47 // pred_region
        _
      $region52: #{mlp_forward.1} parent=47 // pred_fallthru
        _
    $region48: #{mlp_forward.1} parent=5 // pred_fallthru
      _
    %p1105 = scmp.le.s32.totalorder 2, %s13
    // Predicated region
    $region53: #{mlp_forward.1} parent=5 // pred_check
      %p1106 = pneg %p1105
    $region54: #{mlp_forward.1} parent=5 // pred_check_branch
      %1108 = sbr.rel (%p1106) target = $region56
    $region55: #{mlp_forward.1} parent=5 // pred_region
      %s1109 = ssub.s32 %s13, 2
      // Predicated region
      $region57: #{mlp_forward.1} parent=55 // pred_check
        %p1110 = pneg %p194
      $region58: #{mlp_forward.1} parent=55 // pred_check_branch
        %1112 = sbr.rel (%p1110) target = $region60
      $region59: #{mlp_forward.1} parent=55 // pred_region
        %p1113 = scmp.lt.s32.totalorder %s19, 1
        %s1114 = scalar_select %p1113, %s19, 1
        %s1115 = smul.addr %s1114, 4
        %s1116 = scalar_lea.vmem %s7, %s1115
      $region60: #{mlp_forward.1} parent=55 // pred_fallthru
        _
    $region56: #{mlp_forward.1} parent=5 // pred_fallthru
      _
  $region6: #{mlp_forward.1} parent=0 // loop_footer
    %s17 = sadd.s32 1, %s13
  $region7: #{mlp_forward.1} parent=0 // loop_footer_branch
    %12 = sbr.rel target = $region3
  $region8: #{mlp_forward.1} parent=0 // loop_exit
    _

</llo_original>
